<compile_context>
chip_gen: v7x
topology: tpu7x:2x2x1
jax: 0.10.0
libtpu: 0.0.40
codegen_flags: <defaults>
</compile_context>

<pallas_src>
import functools

import jax
import jax.numpy as jnp
from jax.experimental import pallas as pl
from jax.experimental.pallas import tpu as pltpu


# ---------------------------------------------------------------------------
# Per-generation VMEM budgeting.
# ---------------------------------------------------------------------------
def _vmem_budgets():
    """(vmem_limit_bytes, per-block VMEM budget) derived from the hardware."""
    cap = 64 * 1024 * 1024  # conservative default = v7x per-TensorCore VMEM
    try:
        info = pltpu.get_tpu_info()
        cap = int(getattr(info, "vmem_capacity_bytes", cap) or cap)
    except Exception:
        pass
    # v5e/v6e (128 MiB): limit 96 MiB, block budget 40 MiB.
    # v7x (64 MiB/TC):   limit 48 MiB, block budget ~21 MiB.
    vmem_limit = max(32 << 20, min(cap * 3 // 4, cap - (16 << 20)))
    block_budget = max(8 << 20, min(40 << 20, cap // 3))
    return vmem_limit, block_budget


def _round_down_mult(x, m):
    return (x // m) * m


# ---------------------------------------------------------------------------
# Kernels.
# ---------------------------------------------------------------------------
def _bn_fused_kernel(x_ref, g_ref, b_ref, o_ref, *, inv_count, eps):
    """Single-pass BN: whole (N, C, H*W) tensor resident in VMEM."""
    x = x_ref[...].astype(jnp.float32)                       # (N, C, HW)
    s = jnp.sum(jnp.sum(x, axis=-1, keepdims=True), axis=0, keepdims=True)
    sq = jnp.sum(jnp.sum(x * x, axis=-1, keepdims=True), axis=0, keepdims=True)
    mean = s * inv_count                                     # (1, C, 1)
    var = sq * inv_count - mean * mean                       # biased variance
    scale = g_ref[...] * jax.lax.rsqrt(var + eps)            # (1, C, 1)
    shift = b_ref[...] - mean * scale
    o_ref[...] = (x * scale + shift).astype(o_ref.dtype)


def _bn_stats_kernel(x_ref, sum_ref, sq_ref, *, hw, hw_tile, mask_tail):
    """Per-(lane-tile, row) partial sum / sum-of-squares over (N*C, hw_tile)."""
    x = x_ref[...].astype(jnp.float32)                       # (nc_tile, hw_tile)
    if mask_tail:
        # Ragged lane tail: zero out-of-bounds columns (mask BEFORE squaring
        # so stale-VMEM garbage / NaNs cannot leak into the sums).
        col = (jax.lax.broadcasted_iota(jnp.int32, x.shape, 1)
               + pl.program_id(0) * hw_tile)
        x = jnp.where(col < hw, x, 0.0)
    sum_ref[...] = jnp.sum(x, axis=-1, keepdims=True)[None]  # (1, nc_tile, 1)
    sq_ref[...] = jnp.sum(x * x, axis=-1, keepdims=True)[None]


def _bn_norm_kernel(x_ref, scale_ref, shift_ref, o_ref):
    """y = x * scale[row] + shift[row]; ragged tails handled by Pallas'
    bounded writeback of the partial output block."""
    x = x_ref[...].astype(jnp.float32)                       # (nc_tile, hw_tile)
    o_ref[...] = (x * scale_ref[...] + shift_ref[...]).astype(o_ref.dtype)


# ---------------------------------------------------------------------------
# Tile selection for the streaming two-pass path.
# ---------------------------------------------------------------------------
def _two_pass_tiles(nc, hw, itemsize, block_budget):
    """Returns (nc_tile, stats_hw_tile, norm_hw_tile)."""
    pack = max(8, 32 // itemsize)            # sublanes per packed (8,128) tile
    nc_pad = pl.cdiv(nc, pack) * pack
    stats_factor = 2 * itemsize              # input double-buffered; outputs tiny
    norm_factor = 4 * itemsize + 4           # in + out double-buffered + f32 temp

    # Sublane (N*C) tiling only when even a 128-lane, all-rows block would
    # blow the block budget (very large batch*channels).
    if nc_pad * 128 * norm_factor <= block_budget:
        nc_tile, nc_rows = nc, nc_pad        # full dim (no sublane raggedness)
    else:
        nc_tile = max(pack,
                      _round_down_mult(block_budget // (128 * norm_factor), pack))
        nc_tile = min(nc_tile, max(pack, _round_down_mult(nc, pack)))
        nc_rows = nc_tile
    nc_tiles = pl.cdiv(nc, nc_tile)

    def lane_tile(factor):
        if hw <= 128:
            return hw                        # full lane dim is always legal
        hw_floor = _round_down_mult(hw, 128)  # keep block <= array along lanes
        t = block_budget // max(1, nc_rows * factor)
        t = max(128, _round_down_mult(t, 128))
        t = min(t, hw_floor)
        # v7x megacore: ensure >= 2 grid tiles so both TensorCores stream
        # from HBM (only needed when the sublane axis has a single tile).
        if nc_tiles < 2 and pl.cdiv(hw, t) < 2:
            t = max(128, _round_down_mult(pl.cdiv(hw, 2), 128))
        return t

    return nc_tile, lane_tile(stats_factor), lane_tile(norm_factor)


# ---------------------------------------------------------------------------
# Forward.
# ---------------------------------------------------------------------------
def dynamic_bn_forward(x_nchw, gamma, beta, *, eps=1e-5, force_two_pass=False):
    """BatchNorm2d (training-mode batch stats) on an NCHW input via Pallas."""
    n, c, h, w = x_nchw.shape
    hw = h * w
    nc = n * c
    count = n * hw
    dtype = x_nchw.dtype
    itemsize = jnp.dtype(dtype).itemsize

    vmem_limit, block_budget = _vmem_budgets()
    pack = max(8, 32 // itemsize)

    # ---- Fused single-pass path ---------------------------------------------
    # Estimate the VMEM footprint with sublane/lane padding included
    # (in block + out block + one f32 working copy).
    c_pad = pl.cdiv(c, pack) * pack
    hw_lane_pad = pl.cdiv(hw, 128) * 128
    fused_vmem_est = n * c_pad * hw_lane_pad * (2 * itemsize + 4)
    if fused_vmem_est <= block_budget and not force_two_pass:
        x3 = x_nchw.reshape(n, c, hw)            # free relayout, no transpose
        g3 = gamma.reshape(1, c, 1).astype(jnp.float32)
        b3 = beta.reshape(1, c, 1).astype(jnp.float32)
        y3 = pl.pallas_call(
            functools.partial(_bn_fused_kernel, inv_count=1.0 / count, eps=eps),
            out_shape=jax.ShapeDtypeStruct((n, c, hw), dtype),
            compiler_params=pltpu.CompilerParams(vmem_limit_bytes=vmem_limit),
            cost_estimate=pl.CostEstimate(
                flops=5 * n * c * hw, transcendentals=c,
                bytes_accessed=2 * n * c * hw * itemsize),
        )(x3, g3, b3)
        return y3.reshape(n, c, h, w)

    # ---- Streaming two-pass path --------------------------------------------
    nc_tile, stats_tile, norm_tile = _two_pass_tiles(nc, hw, itemsize, block_budget)
    nc_tiles = pl.cdiv(nc, nc_tile)
    stats_tiles = pl.cdiv(hw, stats_tile)
    norm_tiles = pl.cdiv(hw, norm_tile)

    # N folded onto sublanes: (N, C, H, W) -> (N*C, H*W), channels/batch dense
    # on sublanes, spatial dense on lanes.  Free relayout, no pad, no slice.
    x2 = x_nchw.reshape(nc, hw)

    compiler_params = pltpu.CompilerParams(
        dimension_semantics=("parallel", "parallel"),
        vmem_limit_bytes=vmem_limit,
    )

    # Pass 1: partial per-row statistics (pure streaming read, ~1x tensor bytes).
    stats_kernel = functools.partial(
        _bn_stats_kernel, hw=hw, hw_tile=stats_tile,
        mask_tail=(hw % stats_tile) != 0)
    partial_sum, partial_sq = pl.pallas_call(
        stats_kernel,
        out_shape=(
            jax.ShapeDtypeStruct((stats_tiles, nc, 1), jnp.float32),
            jax.ShapeDtypeStruct((stats_tiles, nc, 1), jnp.float32),
        ),
        grid_spec=pltpu.PrefetchScalarGridSpec(
            num_scalar_prefetch=0,
            grid=(stats_tiles, nc_tiles),
            in_specs=[pl.BlockSpec((nc_tile, stats_tile), lambda t, r: (r, t))],
            out_specs=(
                pl.BlockSpec((1, nc_tile, 1), lambda t, r: (t, r, 0)),
                pl.BlockSpec((1, nc_tile, 1), lambda t, r: (t, r, 0)),
            ),
        ),
        compiler_params=compiler_params,
        cost_estimate=pl.CostEstimate(
            flops=3 * nc * hw, transcendentals=0,
            bytes_accessed=nc * hw * itemsize),
    )(x2)

    # Tiny per-channel fold (a handful of (C,)-sized XLA ops).  Sizes that
    # reach this path are HBM-bound multi-tile streams, so the inter-call gap
    # is negligible; launch-latency-sensitive sizes take the fused path where
    # the fold is done in-kernel.
    tot = jnp.sum(partial_sum, axis=0).reshape(n, c)
    tot_sq = jnp.sum(partial_sq, axis=0).reshape(n, c)
    inv_count = jnp.float32(1.0 / count)
    mean = jnp.sum(tot, axis=0) * inv_count                   # (C,)
    var = jnp.sum(tot_sq, axis=0) * inv_count - mean * mean   # biased variance
    scale_c = gamma.astype(jnp.float32) * jax.lax.rsqrt(var + eps)
    shift_c = beta.astype(jnp.float32) - mean * scale_c
    scale = jnp.broadcast_to(scale_c[None, :], (n, c)).reshape(nc, 1)
    shift = jnp.broadcast_to(shift_c[None, :], (n, c)).reshape(nc, 1)

    # Pass 2: normalize (read + write, ~2x tensor bytes).
    y2 = pl.pallas_call(
        _bn_norm_kernel,
        out_shape=jax.ShapeDtypeStruct((nc, hw), dtype),
        grid_spec=pltpu.PrefetchScalarGridSpec(
            num_scalar_prefetch=0,
            grid=(norm_tiles, nc_tiles),
            in_specs=[
                pl.BlockSpec((nc_tile, norm_tile), lambda t, r: (r, t)),
                pl.BlockSpec((nc_tile, 1), lambda t, r: (r, 0)),
                pl.BlockSpec((nc_tile, 1), lambda t, r: (r, 0)),
            ],
            out_specs=pl.BlockSpec((nc_tile, norm_tile), lambda t, r: (r, t)),
        ),
        compiler_params=compiler_params,
        cost_estimate=pl.CostEstimate(
            flops=2 * nc * hw, transcendentals=0,
            bytes_accessed=2 * nc * hw * itemsize),
    )(x2, scale, shift)

    return y2.reshape(n, c, h, w)


def _reference_bn(x_nchw, gamma, beta, eps=1e-5):
    mean = jnp.mean(x_nchw, axis=(0, 2, 3), keepdims=True)
    var = jnp.var(x_nchw, axis=(0, 2, 3), keepdims=True)   # biased
    g = gamma.reshape(1, -1, 1, 1)
    b = beta.reshape(1, -1, 1, 1)
    return (x_nchw - mean) * jax.lax.rsqrt(var + eps) * g + b


if __name__ == "__main__":
    key = jax.random.PRNGKey(0)
    N, C, H, W = 2, 4, 16, 16
    x = jax.random.normal(key, (N, C, H, W), dtype=jnp.float32) * 3.0 + 1.5

    # DynamicBN params: BatchNorm2d(num_features=C) default init (affine=True).
    gamma = jnp.ones((C,), dtype=jnp.float32)
    beta = jnp.zeros((C,), dtype=jnp.float32)

    # TODO(synk): running_mean / running_var buffer updates (training-mode side
    # effect) are not modeled; the forward output does not depend on them.

    # 1) Demo shape -> fused single-pass path.
    out = jax.block_until_ready(dynamic_bn_forward(x, gamma, beta))
    ref = _reference_bn(x, gamma, beta)
    assert out.shape == (N, C, H, W)
    assert jnp.allclose(out, ref, atol=1e-4, rtol=1e-4), "fused path mismatch"

    # 2) Force the streaming two-pass path (including a ragged lane tail:
    #    18*18 = 324 is not a multiple of 128) to validate masking / partial
    #    block writeback.
    x2 = (jax.random.normal(jax.random.PRNGKey(1), (2, 4, 18, 18),
                            dtype=jnp.float32) * 2.0 - 0.5)
    out2 = jax.block_until_ready(
        dynamic_bn_forward(x2, gamma, beta, force_two_pass=True))
    ref2 = _reference_bn(x2, gamma, beta)
    assert out2.shape == x2.shape
    assert jnp.allclose(out2, ref2, atol=1e-4, rtol=1e-4), "two-pass mismatch"

    print("KERNEL_OK")
</pallas_src>

<mosaic_0001>
module attributes {stable_mosaic.version = 11 : i64} {
  func.func @_bn_fused_kernel(%arg0: memref<2x4x256xf32, #tpu.memory_space<vmem>>, %arg1: memref<1x4x1xf32, #tpu.memory_space<vmem>>, %arg2: memref<1x4x1xf32, #tpu.memory_space<vmem>>, %arg3: memref<2x4x256xf32, #tpu.memory_space<vmem>>) attributes {dimension_semantics = [], scalar_prefetch = 0 : i64, scratch_operands = 0 : i64, tpu.core_type = #tpu.core_type<tc>} {
    %c0 = arith.constant 0 : index
    %c0_0 = arith.constant 0 : index
    %c0_1 = arith.constant 0 : index
    %0 = vector.load %arg0[%c0, %c0_0, %c0_1] : memref<2x4x256xf32, #tpu.memory_space<vmem>>, vector<2x4x256xf32>
    %cst = arith.constant dense<0.000000e+00> : vector<2x4xf32>
    %1 = vector.multi_reduction <add>, %0, %cst [2] : vector<2x4x256xf32> to vector<2x4xf32>
    %2 = vector.shape_cast %1 : vector<2x4xf32> to vector<2x4x1xf32>
    %cst_2 = arith.constant dense<0.000000e+00> : vector<4x1xf32>
    %3 = vector.multi_reduction <add>, %2, %cst_2 [0] : vector<2x4x1xf32> to vector<4x1xf32>
    %4 = vector.shape_cast %3 : vector<4x1xf32> to vector<1x4x1xf32>
    %5 = arith.mulf %0, %0 : vector<2x4x256xf32>
    %cst_3 = arith.constant dense<0.000000e+00> : vector<2x4xf32>
    %6 = vector.multi_reduction <add>, %5, %cst_3 [2] : vector<2x4x256xf32> to vector<2x4xf32>
    %7 = vector.shape_cast %6 : vector<2x4xf32> to vector<2x4x1xf32>
    %cst_4 = arith.constant dense<0.000000e+00> : vector<4x1xf32>
    %8 = vector.multi_reduction <add>, %7, %cst_4 [0] : vector<2x4x1xf32> to vector<4x1xf32>
    %9 = vector.shape_cast %8 : vector<4x1xf32> to vector<1x4x1xf32>
    %cst_5 = arith.constant 0.001953125 : f32
    %10 = vector.broadcast %cst_5 : f32 to vector<1x4x1xf32>
    %11 = arith.mulf %4, %10 : vector<1x4x1xf32>
    %cst_6 = arith.constant 0.001953125 : f32
    %12 = vector.broadcast %cst_6 : f32 to vector<1x4x1xf32>
    %13 = arith.mulf %9, %12 : vector<1x4x1xf32>
    %14 = arith.mulf %11, %11 : vector<1x4x1xf32>
    %15 = arith.subf %13, %14 : vector<1x4x1xf32>
    %c0_7 = arith.constant 0 : index
    %c0_8 = arith.constant 0 : index
    %c0_9 = arith.constant 0 : index
    %16 = vector.load %arg1[%c0_7, %c0_8, %c0_9] : memref<1x4x1xf32, #tpu.memory_space<vmem>>, vector<1x4x1xf32>
    %cst_10 = arith.constant 9.99999974E-6 : f32
    %17 = vector.broadcast %cst_10 : f32 to vector<1x4x1xf32>
    %18 = arith.addf %15, %17 : vector<1x4x1xf32>
    %19 = math.rsqrt %18 : vector<1x4x1xf32>
    %20 = arith.mulf %16, %19 : vector<1x4x1xf32>
    %c0_11 = arith.constant 0 : index
    %c0_12 = arith.constant 0 : index
    %c0_13 = arith.constant 0 : index
    %21 = vector.load %arg2[%c0_11, %c0_12, %c0_13] : memref<1x4x1xf32, #tpu.memory_space<vmem>>, vector<1x4x1xf32>
    %22 = arith.mulf %11, %20 : vector<1x4x1xf32>
    %23 = arith.subf %21, %22 : vector<1x4x1xf32>
    %24 = vector.broadcast %20 : vector<1x4x1xf32> to vector<2x4x256xf32>
    %25 = arith.mulf %0, %24 : vector<2x4x256xf32>
    %26 = vector.broadcast %23 : vector<1x4x1xf32> to vector<2x4x256xf32>
    %27 = arith.addf %25, %26 : vector<2x4x256xf32>
    %c0_14 = arith.constant 0 : index
    %c0_15 = arith.constant 0 : index
    %c0_16 = arith.constant 0 : index
    %28 = vector.load %arg3[%c0_14, %c0_15, %c0_16] : memref<2x4x256xf32, #tpu.memory_space<vmem>>, vector<2x4x256xf32>
    tpu.vector_store %arg3[%c0_14, %c0_15, %c0_16], %27 {strides = array<i32>} : memref<2x4x256xf32, #tpu.memory_space<vmem>>, vector<2x4x256xf32>,
    return
  }
}

</mosaic_0001>

<llo_original>
// kernel: tpu_custom_call.1
$region0: #{tpu_custom_call.1}
  #allocation0 [shape = 'u32[]', space=smem, size = 0x4, offset = 0x4, fixed_abs, tag = 'smem constant byte address 0x4 - core index']
  #allocation1 [shape = 'u32[144,128]{1,0:T(1,128)}', space=vmem, size = 0x12000, scoped, tag = 'internal scratch']
  %s0 = inlined_call_operand.hbm [shape: f32[2,4,256], index: 0, kind: input, shape index: {}]
  %s1 = inlined_call_operand.vmem [shape: f32[1,4,1], index: 1, kind: input, shape index: {}]
  %s2 = inlined_call_operand.vmem [shape: f32[1,4,1], index: 2, kind: input, shape index: {}]
  %s3 = inlined_call_operand.hbm [shape: f32[2,4,256], index: 3, kind: output, shape index: {}]
  %s4 = sld [smem:[#allocation0]]
  $region26: #{tpu_custom_call.1} parent=0
    _
  %s6 = ssub.s32 1, %s4
  %s7 = scalar_select 0, %s6, %s4
  $region1: #{tpu_custom_call.1} parent=0
    #allocation2 [shape = 'u8[8192]{0}', space=vmem, size = 0x2000, scoped, tag = 'input window, operand 0, single buffered']
    #allocation3 [shape = 's32[1]{0}', space=sflag, size = 0x4, scoped, tag = 'scoped memory for tpu_custom_call.1']
    #allocation4 [shape = 's32[1]{0}', space=sflag, size = 0x4, scoped, tag = 'scoped memory for tpu_custom_call.1']
    #allocation5 [shape = 'u8[8192]{0}', space=vmem, size = 0x2000, scoped, tag = 'output window, operand 0, single buffered']
    %8 = vsyncpa [#allocation3], 0
    %9 = vsyncpa [#allocation4], 0
    // Predicated region
    $region2: #{tpu_custom_call.1} parent=1 // pred_check
      _
    $region3: #{tpu_custom_call.1} parent=1 // pred_check_branch
      %11 = sbr.rel (0) target = $region5
    $region4: #{tpu_custom_call.1} parent=1 // pred_region
      %s13 = ssub.s32 256, 256
      %14 = vsyncadd [#allocation3], %s13
      %s15 = sshll.u32 [#allocation2], 4
      %s16 = int_to_ptr.vmem [resolvable:$true] %s15
      %21 = dma.hbm_to_vmem [thread:$0]  %s0, 256, %s16, [#allocation3], 128, 128, 8
    $region5: #{tpu_custom_call.1} parent=1 // pred_fallthru
      _
    // Predicated region
    $region6: #{tpu_custom_call.1} parent=1 // pred_check
      _
    $region7: #{tpu_custom_call.1} parent=1 // pred_check_branch
      %23 = sbr.rel (0) target = $region9
    $region8: #{tpu_custom_call.1} parent=1 // pred_region
      _
    $region9: #{tpu_custom_call.1} parent=1 // pred_fallthru
      _
    // Predicated region
    $region10: #{tpu_custom_call.1} parent=1 // pred_check
      _
    $region11: #{tpu_custom_call.1} parent=1 // pred_check_branch
      %25 = sbr.rel (0) target = $region13
    $region12: #{tpu_custom_call.1} parent=1 // pred_region
      _
    $region13: #{tpu_custom_call.1} parent=1 // pred_fallthru
      _
    // Predicated region
    $region14: #{tpu_custom_call.1} parent=1 // pred_check
      _
    $region15: #{tpu_custom_call.1} parent=1 // pred_check_branch
      %27 = sbr.rel (0) target = $region17
    $region16: #{tpu_custom_call.1} parent=1 // pred_region
      %28 = dma.done [#allocation3], 256
    $region17: #{tpu_custom_call.1} parent=1 // pred_fallthru
      _
    %v29 = vld [vmem:[#allocation2] sm:$0xff]
    %v30 = vld [vmem:[#allocation2 + $0x8] sm:$0xff]
    %v33 = vcombine.high %v29, %v29
    %v34 = vcombine.high %v30, %v30
    %vm37 = vcmask 1043456
    %v38 = vsel %vm37, %v29, 0.0
    %v39 = vsel %vm37, %v33, 0.0
    %v40 = vadd.f32 %v38, %v39
    %41 = vadd.xlane.f32.xlu0 %v40
    %v42 = vpop.xlane.xlu0 %41
    %v43 = vsel %vm37, %v30, 0.0
    %v44 = vsel %vm37, %v34, 0.0
    %v45 = vadd.f32 %v43, %v44
    %46 = vadd.xlane.f32.xlu0 %v45
    %v47 = vpop.xlane.xlu0 %46
    %v48 = vsel %vm37, %v42, 0.0
    %v49 = vsel %vm37, %v47, 0.0
    %v50 = vadd.f32 %v48, %v49
    %v51 = vmul.f32 %v29, %v29
    %v52 = vmul.f32 %v30, %v30
    %v55 = vcombine.high %v51, %v51
    %v56 = vcombine.high %v52, %v52
    %v59 = vsel %vm37, %v51, 0.0
    %v60 = vsel %vm37, %v55, 0.0
    %v61 = vadd.f32 %v59, %v60
    %62 = vadd.xlane.f32.xlu0 %v61
    %v63 = vpop.xlane.xlu0 %62
    %v64 = vsel %vm37, %v52, 0.0
    %v65 = vsel %vm37, %v56, 0.0
    %v66 = vadd.f32 %v64, %v65
    %67 = vadd.xlane.f32.xlu0 %v66
    %v68 = vpop.xlane.xlu0 %67
    %v69 = vsel %vm37, %v63, 0.0
    %v70 = vsel %vm37, %v68, 0.0
    %v71 = vadd.f32 %v69, %v70
    %v72 = vmul.f32 %v50, 0.001953125
    %v73 = vmul.f32 %v71, 0.001953125
    %v74 = vmul.f32 %v72, %v72
    %v75 = vsub.f32 %v73, %v74
    %v76 = vld [vmem:[%s1] sm:$0xf]
    %v77 = vadd.f32 %v75, 1e-05
    %v78 = vrsqrt.pop %v77
    %v79 = vmul.f32 %v76, %v78
    %v80 = vld [vmem:[%s2] sm:$0xf]
    %v81 = vmul.f32 %v72, %v79
    %v82 = vsub.f32 %v80, %v81
    %84 = vset.pattern.permute.xlu0 0
    %85 = vperm.xlu0 %84, %v79
    %v86 = vpop.permute.xlu0 %85
    %v88 = vunpack.c.l.s4 839922192
    %v89 = vunpack.c.0.s8 %v88
    %v90 = vlaneseq
    %v91 = vshrl.u32 %v90, 7
    %v92 = vsub.s32 %v89, %v91
    %v93 = vrot.slane %v86, %v92
    %v95 = vmul.f32 %v29, %v93
    %v96 = vmul.f32 %v30, %v93
    %98 = vset.pattern.permute.xlu0 0
    %99 = vperm.xlu0 %98, %v82
    %v100 = vpop.permute.xlu0 %99
    %v102 = vunpack.c.l.s4 839922192
    %v103 = vunpack.c.0.s8 %v102
    %v104 = vlaneseq
    %v105 = vshrl.u32 %v104, 7
    %v106 = vsub.s32 %v103, %v105
    %v107 = vrot.slane %v100, %v106
    %v109 = vadd.f32 %v95, %v107
    %v110 = vadd.f32 %v96, %v107
    %111 = vst [vmem:[#allocation5] sm:$0xff] %v109
    %112 = vst [vmem:[#allocation5 + $0x8] sm:$0xff] %v110
    // Predicated region
    $region18: #{tpu_custom_call.1} parent=1 // pred_check
      _
    $region19: #{tpu_custom_call.1} parent=1 // pred_check_branch
      %114 = sbr.rel (0) target = $region21
    $region20: #{tpu_custom_call.1} parent=1 // pred_region
      %s116 = ssub.s32 256, 256
      %117 = vsyncadd [#allocation4], %s116
      %s118 = sshll.u32 [#allocation5], 4
      %s119 = int_to_ptr.vmem [resolvable:$true] %s118
      %124 = dma.vmem_to_hbm [thread:$0]  %s119, 256, %s3, [#allocation4], 128, 128, 8
    $region21: #{tpu_custom_call.1} parent=1 // pred_fallthru
      _
    // Predicated region
    $region22: #{tpu_custom_call.1} parent=1 // pred_check
      _
    $region23: #{tpu_custom_call.1} parent=1 // pred_check_branch
      %126 = sbr.rel (0) target = $region25
    $region24: #{tpu_custom_call.1} parent=1 // pred_region
      %127 = dma.done [#allocation4], 256
    $region25: #{tpu_custom_call.1} parent=1 // pred_fallthru
      _
    %128 = vsyncpa [#allocation3], 1
    %129 = vsyncpa [#allocation4], 1

</llo_original>
